<compile_context>
chip_gen: v7x
topology: tpu7x:2x2x1
jax: 0.10.0
libtpu: 0.0.40
codegen_flags: <defaults>
</compile_context>

<pallas_src>
import math
import functools

import jax
import jax.numpy as jnp
from jax import lax
from jax.experimental import pallas as pl
from jax.experimental.pallas import tpu as pltpu

# ----------------------------- model sizes (toy) -----------------------------
HIDDEN = 32          # hidden_dim
N_ATOMS = 16
N_MOL = 4
ATOM_PROP_DIM = 8
MOL_PROP_DIM = 6
N_ATOM_TYPES = 10

# ------------------- TPU-friendly padded sizes (lane = 128) -------------------
HP = 128                                          # hidden padded to a full lane width
N_PAD = max(8, ((N_ATOMS + 7) // 8) * 8)          # 16  (sublane multiple of 8)
NMOL_PAD = max(8, ((N_MOL + 7) // 8) * 8)         # 8
APROP_ROWS = 128                                  # atom-prop rows -> lane-dense atom logits
MPROP_ROWS = 128                                  # mol-prop rows  -> lane-dense mol logits
APD_PAD = 128
MPD_PAD = 128


def _pad2(a, rows, cols, dtype):
    """Zero-pad a 2-D array to (rows, cols) and cast."""
    out = jnp.zeros((rows, cols), dtype)
    return out.at[: a.shape[0], : a.shape[1]].set(a.astype(dtype))


# ------------------------------ fused Pallas kernel ------------------------------

def _clip_fused_kernel(scale_ref, batch_ref, x_ref,
                       aprop_ref, wa_ref, ba_ref,
                       mprop_ref, wm_ref, bm_ref,
                       la_ref, lm_ref):
    f32 = jnp.float32
    bf16 = jnp.bfloat16
    scale = scale_ref[0, 0]

    # --- property encoders: bf16 MXU matmul, f32 accumulate, fused bias add ---
    a_emb = lax.dot_general(aprop_ref[...], wa_ref[...],
                            (((1,), (0,)), ((), ())),
                            preferred_element_type=f32) + ba_ref[...]
    m_emb = lax.dot_general(mprop_ref[...], wm_ref[...],
                            (((1,), (0,)), ((), ())),
                            preferred_element_type=f32) + bm_ref[...]

    # --- segment sum scatter(x, batch): one-hot (bf16) @ x on the MXU ---
    # TODO(synk): for realistic N_ATOMS this should become a scalar-prefetched,
    # blocked accumulate instead of a dense (nmol, N) one-hot.
    x = x_ref[...]                                           # f32 (N_PAD, HP)
    seg = batch_ref[...]                                     # int32 (1, N_PAD), pads = -1
    rows = lax.broadcasted_iota(jnp.int32, (lm_ref.shape[0], x.shape[0]), 0)
    onehot = (seg == rows).astype(bf16)                      # (NMOL_PAD, N_PAD)
    x_mol = jnp.dot(onehot, x.astype(bf16),
                    preferred_element_type=f32)              # (NMOL_PAD, HP)

    # --- L2 normalize in f32 (rsqrt -> EUP; eps keeps padded zero rows finite) ---
    def nrm(v):
        return v * lax.rsqrt(jnp.sum(v * v, axis=-1, keepdims=True) + 1e-12)

    # Fold logit_scale into the small lhs operand (cheaper than scaling the output).
    xa = (nrm(x) * scale).astype(bf16)
    xm = (nrm(x_mol) * scale).astype(bf16)
    pa = nrm(a_emb).astype(bf16)
    pm = nrm(m_emb).astype(bf16)

    # --- cosine-similarity logits: contract on last dims (no explicit transpose) ---
    la_ref[...] = lax.dot_general(xa, pa, (((1,), (1,)), ((), ())),
                                  preferred_element_type=f32)
    lm_ref[...] = lax.dot_general(xm, pm, (((1,), (1,)), ((), ())),
                                  preferred_element_type=f32)


def pallas_clip_hot_path(x, batch, atom_properties, mol_properties,
                         W_atom, b_atom, W_mol, b_mol, logit_scale, n_mol):
    """One fused pallas_call for the whole contrastive hot path.

    Returns (logits_per_molecule_atom [N, Na_prop], logits_per_molecule_mol [n_mol, Nm_prop]).
    """
    n = x.shape[0]
    na_prop = atom_properties.shape[0]
    nm_prop = mol_properties.shape[0]
    bf16 = jnp.bfloat16

    x_p = _pad2(x, N_PAD, HP, jnp.float32)                      # normalize needs f32
    batch_p = jnp.full((1, N_PAD), -1, jnp.int32).at[0, :n].set(batch.astype(jnp.int32))
    aprop_p = _pad2(atom_properties, APROP_ROWS, APD_PAD, bf16)
    wa_p = _pad2(W_atom, APD_PAD, HP, bf16)
    ba_p = _pad2(b_atom.reshape(1, -1), 1, HP, jnp.float32)
    mprop_p = _pad2(mol_properties, MPROP_ROWS, MPD_PAD, bf16)
    wm_p = _pad2(W_mol, MPD_PAD, HP, bf16)
    bm_p = _pad2(b_mol.reshape(1, -1), 1, HP, jnp.float32)
    scale = jnp.reshape(jnp.exp(logit_scale), (1, 1)).astype(jnp.float32)

    vmem = pl.BlockSpec(memory_space=pltpu.MemorySpace.VMEM)
    smem = pl.BlockSpec(memory_space=pltpu.MemorySpace.SMEM)

    la_pad, lm_pad = pl.pallas_call(
        _clip_fused_kernel,
        out_shape=(jax.ShapeDtypeStruct((N_PAD, APROP_ROWS), jnp.float32),
                   jax.ShapeDtypeStruct((NMOL_PAD, MPROP_ROWS), jnp.float32)),
        in_specs=[smem] + [vmem] * 8,
        out_specs=(vmem, vmem),
        # TODO(synk): at realistic sizes add a grid + BlockSpec row tiling
        # (parallel dimension_semantics) instead of whole-array VMEM blocks.
    )(scale, batch_p, x_p, aprop_p, wa_p, ba_p, mprop_p, wm_p, bm_p)

    logits_per_molecule_atom = la_pad[:n, :na_prop]
    logits_per_molecule_mol = lm_pad[:n_mol, :nm_prop]
    return logits_per_molecule_atom, logits_per_molecule_mol


# -------------------------- synthetic parameter init --------------------------

def init_params(key):
    ks = jax.random.split(key, 8)

    def w(k, shape, scale=0.1):
        return scale * jax.random.normal(k, shape, jnp.float32)

    return {
        # synthetic molecule encoder (external module in the original code)
        "z_emb": w(ks[0], (N_ATOM_TYPES, HIDDEN)),
        "W_pos": w(ks[1], (3, HIDDEN)),
        "W1": w(ks[2], (HIDDEN, HIDDEN)),
        "b1": jnp.zeros((HIDDEN,), jnp.float32),
        "W_vec": w(ks[3], (HIDDEN, HIDDEN)),
        # EquivariantScalar.pre_reduce (2*hidden -> hidden//2 -> 1)
        "Ws1": w(ks[4], (2 * HIDDEN, HIDDEN // 2)),
        "bs1": jnp.zeros((HIDDEN // 2,), jnp.float32),
        "Ws2": w(ks[5], (HIDDEN // 2, 1)),
        "bs2": jnp.zeros((1,), jnp.float32),
        # property encoders (external linear modules)
        "W_atom": w(ks[6], (ATOM_PROP_DIM, HIDDEN)),
        "b_atom": 0.01 * jnp.ones((HIDDEN,), jnp.float32),
        "W_mol": w(ks[7], (MOL_PROP_DIM, HIDDEN)),
        "b_mol": 0.01 * jnp.ones((HIDDEN,), jnp.float32),
        # nn.Parameter(torch.ones([]) * np.log(1/0.07))
        "logit_scale": jnp.asarray(math.log(1.0 / 0.07), jnp.float32),
    }


# ------------------------------- CLIP forward -------------------------------

@functools.partial(jax.jit, static_argnums=(6,))
def clip_forward(params, z, pos, batch, atom_properties, mol_properties, nmol):
    # --- differentiable molecule-encoder path (plain JAX: needs autograd) ---
    def molecule_encoder(pos_):
        emb = params["z_emb"][z]                                    # [N, H]
        h = emb + jnp.tanh(pos_ @ params["W_pos"])                  # [N, H]
        x = jax.nn.silu(h @ params["W1"] + params["b1"])            # [N, H]
        vec = pos_[:, :, None] * (x @ params["W_vec"])[:, None, :]  # [N, 3, H]
        return x, vec

    def pre_reduce(x, vec):
        vec_norm = jnp.sqrt(jnp.sum(vec * vec, axis=1) + 1e-8)      # [N, H]
        hcat = jnp.concatenate([x, vec_norm], axis=-1)              # [N, 2H]
        hcat = jax.nn.silu(hcat @ params["Ws1"] + params["bs1"])    # [N, H//2]
        return hcat @ params["Ws2"] + params["bs2"]                 # [N, 1]

    # TODO(synk): the autograd force term (dy = d out / d pos) has no Pallas
    # equivalent; it is computed with jax.grad over the plain-JAX encoder path.
    def energy(pos_):
        x_, vec_ = molecule_encoder(pos_)
        out_ = pre_reduce(x_, vec_)
        return jnp.sum(out_), (out_, x_, vec_)

    (_, (out, x, _vec)), dy = jax.value_and_grad(energy, has_aux=True)(pos)

    # --- fused Pallas hot path (scatter + property linears + normalize + logits) ---
    logits_per_molecule_atom, logits_per_molecule_mol = pallas_clip_hot_path(
        x, batch, atom_properties, mol_properties,
        params["W_atom"], params["b_atom"], params["W_mol"], params["b_mol"],
        params["logit_scale"], nmol)

    logits_per_atom_molecule = logits_per_molecule_atom.T
    labels_atom = jnp.arange(logits_per_atom_molecule.shape[0], dtype=jnp.int32)

    logits_per_mol_molecule = logits_per_molecule_mol.T
    labels_mol = jnp.arange(logits_per_molecule_mol.shape[0], dtype=jnp.int32)

    return (
        logits_per_molecule_mol,
        logits_per_mol_molecule,
        logits_per_molecule_atom,
        logits_per_atom_molecule,
        labels_mol,
        labels_atom,
        out,
        -dy,
    )


# ----------------------------------- main -----------------------------------

if __name__ == "__main__":
    key = jax.random.PRNGKey(0)
    k_params, k_z, k_pos, k_ap, k_mp = jax.random.split(key, 5)

    params = init_params(k_params)

    z = jax.random.randint(k_z, (N_ATOMS,), 1, N_ATOM_TYPES, dtype=jnp.int32)
    pos = jax.random.normal(k_pos, (N_ATOMS, 3), jnp.float32)
    batch = jnp.repeat(jnp.arange(N_MOL, dtype=jnp.int32), N_ATOMS // N_MOL)
    atom_properties = jax.random.normal(k_ap, (N_ATOMS, ATOM_PROP_DIM), jnp.float32)
    mol_properties = jax.random.normal(k_mp, (N_MOL, MOL_PROP_DIM), jnp.float32)

    outputs = clip_forward(params, z, pos, batch, atom_properties, mol_properties, N_MOL)
    outputs = jax.block_until_ready(outputs)

    (lp_mol, lp_mol_t, lp_atom, lp_atom_t, labels_mol, labels_atom, out, neg_dy) = outputs
    assert lp_mol.shape == (N_MOL, N_MOL)
    assert lp_mol_t.shape == (N_MOL, N_MOL)
    assert lp_atom.shape == (N_ATOMS, N_ATOMS)
    assert lp_atom_t.shape == (N_ATOMS, N_ATOMS)
    assert labels_mol.shape == (N_MOL,)
    assert labels_atom.shape == (N_ATOMS,)
    assert out.shape == (N_ATOMS, 1)
    assert neg_dy.shape == (N_ATOMS, 3)
    assert all(bool(jnp.all(jnp.isfinite(o))) for o in (lp_mol, lp_atom, out, neg_dy))

    print("KERNEL_OK")
</pallas_src>

<mosaic_0001>
module attributes {stable_mosaic.version = 11 : i64} {
  func.func @_clip_fused_kernel(%arg0: memref<1x1xf32, #tpu.memory_space<smem>>, %arg1: memref<1x16xi32, #tpu.memory_space<vmem>>, %arg2: memref<16x128xf32, #tpu.memory_space<vmem>>, %arg3: memref<128x128xbf16, #tpu.memory_space<vmem>>, %arg4: memref<128x128xbf16, #tpu.memory_space<vmem>>, %arg5: memref<1x128xf32, #tpu.memory_space<vmem>>, %arg6: memref<128x128xbf16, #tpu.memory_space<vmem>>, %arg7: memref<128x128xbf16, #tpu.memory_space<vmem>>, %arg8: memref<1x128xf32, #tpu.memory_space<vmem>>, %arg9: memref<16x128xf32, #tpu.memory_space<vmem>>, %arg10: memref<8x128xf32, #tpu.memory_space<vmem>>) attributes {dimension_semantics = [], scalar_prefetch = 0 : i64, scratch_operands = 0 : i64, tpu.core_type = #tpu.core_type<tc>} {
    %c0 = arith.constant 0 : index
    %c0_0 = arith.constant 0 : index
    %0 = memref.load %arg0[%c0, %c0_0] : memref<1x1xf32, #tpu.memory_space<smem>>
    %c0_1 = arith.constant 0 : index
    %c0_2 = arith.constant 0 : index
    %1 = vector.load %arg3[%c0_1, %c0_2] : memref<128x128xbf16, #tpu.memory_space<vmem>>, vector<128x128xbf16>
    %c0_3 = arith.constant 0 : index
    %c0_4 = arith.constant 0 : index
    %2 = vector.load %arg4[%c0_3, %c0_4] : memref<128x128xbf16, #tpu.memory_space<vmem>>, vector<128x128xbf16>
    %cst = arith.constant dense<0.000000e+00> : vector<128x128xf32>
    %3 = tpu.matmul %1, %2, %cst {dimension_numbers = #tpu.dot_dimension_numbers<[1], [0], [0], [1], [0, 0, 1, 1], [], []>} : vector<128x128xbf16>, vector<128x128xbf16>, vector<128x128xf32> -> vector<128x128xf32>
    %c0_5 = arith.constant 0 : index
    %c0_6 = arith.constant 0 : index
    %4 = vector.load %arg5[%c0_5, %c0_6] : memref<1x128xf32, #tpu.memory_space<vmem>>, vector<1x128xf32>
    %5 = vector.broadcast %4 : vector<1x128xf32> to vector<128x128xf32>
    %6 = arith.addf %3, %5 : vector<128x128xf32>
    %c0_7 = arith.constant 0 : index
    %c0_8 = arith.constant 0 : index
    %7 = vector.load %arg6[%c0_7, %c0_8] : memref<128x128xbf16, #tpu.memory_space<vmem>>, vector<128x128xbf16>
    %c0_9 = arith.constant 0 : index
    %c0_10 = arith.constant 0 : index
    %8 = vector.load %arg7[%c0_9, %c0_10] : memref<128x128xbf16, #tpu.memory_space<vmem>>, vector<128x128xbf16>
    %cst_11 = arith.constant dense<0.000000e+00> : vector<128x128xf32>
    %9 = tpu.matmul %7, %8, %cst_11 {dimension_numbers = #tpu.dot_dimension_numbers<[1], [0], [0], [1], [0, 0, 1, 1], [], []>} : vector<128x128xbf16>, vector<128x128xbf16>, vector<128x128xf32> -> vector<128x128xf32>
    %c0_12 = arith.constant 0 : index
    %c0_13 = arith.constant 0 : index
    %10 = vector.load %arg8[%c0_12, %c0_13] : memref<1x128xf32, #tpu.memory_space<vmem>>, vector<1x128xf32>
    %11 = vector.broadcast %10 : vector<1x128xf32> to vector<128x128xf32>
    %12 = arith.addf %9, %11 : vector<128x128xf32>
    %c0_14 = arith.constant 0 : index
    %c0_15 = arith.constant 0 : index
    %13 = vector.load %arg2[%c0_14, %c0_15] : memref<16x128xf32, #tpu.memory_space<vmem>>, vector<16x128xf32>
    %c0_16 = arith.constant 0 : index
    %c0_17 = arith.constant 0 : index
    %14 = vector.load %arg1[%c0_16, %c0_17] : memref<1x16xi32, #tpu.memory_space<vmem>>, vector<1x16xi32>
    %15 = tpu.iota {dimensions = array<i32: 0>} : vector<8x16xi32>
    %16 = vector.broadcast %14 : vector<1x16xi32> to vector<8x16xi32>
    %17 = arith.cmpi eq, %16, %15 : vector<8x16xi32>
    %18 = arith.extui %17 : vector<8x16xi1> to vector<8x16xi32>
    %19 = arith.sitofp %18 : vector<8x16xi32> to vector<8x16xf32>
    %20 = arith.truncf %19 : vector<8x16xf32> to vector<8x16xbf16>
    %21 = arith.truncf %13 : vector<16x128xf32> to vector<16x128xbf16>
    %cst_18 = arith.constant dense<0.000000e+00> : vector<8x128xf32>
    %22 = tpu.matmul %20, %21, %cst_18 {dimension_numbers = #tpu.dot_dimension_numbers<[1], [0], [0], [1], [0, 0, 1, 1], [], []>} : vector<8x16xbf16>, vector<16x128xbf16>, vector<8x128xf32> -> vector<8x128xf32>
    %23 = arith.mulf %13, %13 : vector<16x128xf32>
    %cst_19 = arith.constant dense<0.000000e+00> : vector<16xf32>
    %24 = vector.multi_reduction <add>, %23, %cst_19 [1] : vector<16x128xf32> to vector<16xf32>
    %25 = vector.shape_cast %24 : vector<16xf32> to vector<16x1xf32>
    %cst_20 = arith.constant 9.99999996E-13 : f32
    %26 = vector.broadcast %cst_20 : f32 to vector<16x1xf32>
    %27 = arith.addf %25, %26 : vector<16x1xf32>
    %28 = math.rsqrt %27 : vector<16x1xf32>
    %29 = vector.broadcast %28 : vector<16x1xf32> to vector<16x128xf32>
    %30 = arith.mulf %13, %29 : vector<16x128xf32>
    %31 = vector.broadcast %0 : f32 to vector<16x128xf32>
    %32 = arith.mulf %30, %31 : vector<16x128xf32>
    %33 = arith.truncf %32 : vector<16x128xf32> to vector<16x128xbf16>
    %34 = arith.mulf %22, %22 : vector<8x128xf32>
    %cst_21 = arith.constant dense<0.000000e+00> : vector<8xf32>
    %35 = vector.multi_reduction <add>, %34, %cst_21 [1] : vector<8x128xf32> to vector<8xf32>
    %36 = vector.shape_cast %35 : vector<8xf32> to vector<8x1xf32>
    %cst_22 = arith.constant 9.99999996E-13 : f32
    %37 = vector.broadcast %cst_22 : f32 to vector<8x1xf32>
    %38 = arith.addf %36, %37 : vector<8x1xf32>
    %39 = math.rsqrt %38 : vector<8x1xf32>
    %40 = vector.broadcast %39 : vector<8x1xf32> to vector<8x128xf32>
    %41 = arith.mulf %22, %40 : vector<8x128xf32>
    %42 = vector.broadcast %0 : f32 to vector<8x128xf32>
    %43 = arith.mulf %41, %42 : vector<8x128xf32>
    %44 = arith.truncf %43 : vector<8x128xf32> to vector<8x128xbf16>
    %45 = arith.mulf %6, %6 : vector<128x128xf32>
    %cst_23 = arith.constant dense<0.000000e+00> : vector<128xf32>
    %46 = vector.multi_reduction <add>, %45, %cst_23 [1] : vector<128x128xf32> to vector<128xf32>
    %47 = vector.shape_cast %46 : vector<128xf32> to vector<128x1xf32>
    %cst_24 = arith.constant 9.99999996E-13 : f32
    %48 = vector.broadcast %cst_24 : f32 to vector<128x1xf32>
    %49 = arith.addf %47, %48 : vector<128x1xf32>
    %50 = math.rsqrt %49 : vector<128x1xf32>
    %51 = vector.broadcast %50 : vector<128x1xf32> to vector<128x128xf32>
    %52 = arith.mulf %6, %51 : vector<128x128xf32>
    %53 = arith.truncf %52 : vector<128x128xf32> to vector<128x128xbf16>
    %54 = arith.mulf %12, %12 : vector<128x128xf32>
    %cst_25 = arith.constant dense<0.000000e+00> : vector<128xf32>
    %55 = vector.multi_reduction <add>, %54, %cst_25 [1] : vector<128x128xf32> to vector<128xf32>
    %56 = vector.shape_cast %55 : vector<128xf32> to vector<128x1xf32>
    %cst_26 = arith.constant 9.99999996E-13 : f32
    %57 = vector.broadcast %cst_26 : f32 to vector<128x1xf32>
    %58 = arith.addf %56, %57 : vector<128x1xf32>
    %59 = math.rsqrt %58 : vector<128x1xf32>
    %60 = vector.broadcast %59 : vector<128x1xf32> to vector<128x128xf32>
    %61 = arith.mulf %12, %60 : vector<128x128xf32>
    %62 = arith.truncf %61 : vector<128x128xf32> to vector<128x128xbf16>
    %cst_27 = arith.constant dense<0.000000e+00> : vector<16x128xf32>
    %63 = tpu.matmul %33, %53, %cst_27 {dimension_numbers = #tpu.dot_dimension_numbers<[1], [1], [0], [0], [0, 0, 1, 0], [], []>} : vector<16x128xbf16>, vector<128x128xbf16>, vector<16x128xf32> -> vector<16x128xf32>
    %c0_28 = arith.constant 0 : index
    %c0_29 = arith.constant 0 : index
    %64 = vector.load %arg9[%c0_28, %c0_29] : memref<16x128xf32, #tpu.memory_space<vmem>>, vector<16x128xf32>
    tpu.vector_store %arg9[%c0_28, %c0_29], %63 {strides = array<i32>} : memref<16x128xf32, #tpu.memory_space<vmem>>, vector<16x128xf32>,
    %cst_30 = arith.constant dense<0.000000e+00> : vector<8x128xf32>
    %65 = tpu.matmul %44, %62, %cst_30 {dimension_numbers = #tpu.dot_dimension_numbers<[1], [1], [0], [0], [0, 0, 1, 0], [], []>} : vector<8x128xbf16>, vector<128x128xbf16>, vector<8x128xf32> -> vector<8x128xf32>
    %c0_31 = arith.constant 0 : index
    %c0_32 = arith.constant 0 : index
    %66 = vector.load %arg10[%c0_31, %c0_32] : memref<8x128xf32, #tpu.memory_space<vmem>>, vector<8x128xf32>
    tpu.vector_store %arg10[%c0_31, %c0_32], %65 {strides = array<i32>} : memref<8x128xf32, #tpu.memory_space<vmem>>, vector<8x128xf32>,
    return
  }
}

</mosaic_0001>

<llo_original>
// kernel: clip_forward.1
$region0: #{clip_forward.1}
  #allocation0 [shape = 'u32[]', space=smem, size = 0x4, offset = 0x4, fixed_abs, tag = 'smem constant byte address 0x4 - core index']
  #allocation1 [shape = 'u32[144,128]{1,0:T(1,128)}', space=vmem, size = 0x12000, scoped, tag = 'internal scratch']
  #allocation2 [shape = 'f32[1,1]{1,0:T(1,128)S(6)}', space=smem, size = 0x200, scoped, tag = 'scoped memory for clip_forward.1']
  %s0 = inlined_call_operand.<no memory space> [shape: f32[1,1], index: 0, kind: input, shape index: {}]
  %s1 = inlined_call_operand.vmem [shape: s32[1,16], index: 1, kind: input, shape index: {}]
  %s2 = inlined_call_operand.vmem [shape: f32[16,128], index: 2, kind: input, shape index: {}]
  %s3 = inlined_call_operand.vmem [shape: bf16[128,128], index: 3, kind: input, shape index: {}]
  %s4 = inlined_call_operand.vmem [shape: bf16[128,128], index: 4, kind: input, shape index: {}]
  %s5 = inlined_call_operand.vmem [shape: f32[1,128], index: 5, kind: input, shape index: {}]
  %s6 = inlined_call_operand.vmem [shape: bf16[128,128], index: 6, kind: input, shape index: {}]
  %s7 = inlined_call_operand.vmem [shape: bf16[128,128], index: 7, kind: input, shape index: {}]
  %s8 = inlined_call_operand.vmem [shape: f32[1,128], index: 8, kind: input, shape index: {}]
  %s9 = inlined_call_operand.vmem [shape: f32[16,128], index: 9, kind: output, shape index: {0}]
  %s10 = inlined_call_operand.vmem [shape: f32[8,128], index: 10, kind: output, shape index: {1}]
  %11 = xla_tuple %s9, %s10
  %s12 = sld [smem:[#allocation0]]
  $region54: #{clip_forward.1} parent=0
    _
  %s14 = ssub.s32 1, %s12
  %s15 = scalar_select 0, %s14, %s12
  %16 = sst [smem:[#allocation2]] %s0
  // Predicated region
  $region2: #{clip_forward.1} parent=0 // pred_check
    _
  $region3: #{clip_forward.1} parent=0 // pred_check_branch
    %18 = sbr.rel (0) target = $region5
  $region4: #{clip_forward.1} parent=0 // pred_region
    _
  $region5: #{clip_forward.1} parent=0 // pred_fallthru
    _
  // Predicated region
  $region6: #{clip_forward.1} parent=0 // pred_check
    _
  $region7: #{clip_forward.1} parent=0 // pred_check_branch
    %20 = sbr.rel (0) target = $region9
  $region8: #{clip_forward.1} parent=0 // pred_region
    _
  $region9: #{clip_forward.1} parent=0 // pred_fallthru
    _
  // Predicated region
  $region10: #{clip_forward.1} parent=0 // pred_check
    _
  $region11: #{clip_forward.1} parent=0 // pred_check_branch
    %22 = sbr.rel (0) target = $region13
  $region12: #{clip_forward.1} parent=0 // pred_region
    _
  $region13: #{clip_forward.1} parent=0 // pred_fallthru
    _
  // Predicated region
  $region14: #{clip_forward.1} parent=0 // pred_check
    _
  $region15: #{clip_forward.1} parent=0 // pred_check_branch
    %24 = sbr.rel (0) target = $region17
  $region16: #{clip_forward.1} parent=0 // pred_region
    _
  $region17: #{clip_forward.1} parent=0 // pred_fallthru
    _
  // Predicated region
  $region18: #{clip_forward.1} parent=0 // pred_check
    _
  $region19: #{clip_forward.1} parent=0 // pred_check_branch
    %26 = sbr.rel (0) target = $region21
  $region20: #{clip_forward.1} parent=0 // pred_region
    _
  $region21: #{clip_forward.1} parent=0 // pred_fallthru
    _
  // Predicated region
  $region22: #{clip_forward.1} parent=0 // pred_check
    _
  $region23: #{clip_forward.1} parent=0 // pred_check_branch
    %28 = sbr.rel (0) target = $region25
  $region24: #{clip_forward.1} parent=0 // pred_region
    _
  $region25: #{clip_forward.1} parent=0 // pred_fallthru
    _
  // Predicated region
  $region26: #{clip_forward.1} parent=0 // pred_check
    _
  $region27: #{clip_forward.1} parent=0 // pred_check_branch
    %30 = sbr.rel (0) target = $region29
  $region28: #{clip_forward.1} parent=0 // pred_region
    _
  $region29: #{clip_forward.1} parent=0 // pred_fallthru
    _
  // Predicated region
  $region30: #{clip_forward.1} parent=0 // pred_check
    _
  $region31: #{clip_forward.1} parent=0 // pred_check_branch
    %32 = sbr.rel (0) target = $region33
  $region32: #{clip_forward.1} parent=0 // pred_region
    _
  $region33: #{clip_forward.1} parent=0 // pred_fallthru
    _
  // Predicated region
  $region34: #{clip_forward.1} parent=0 // pred_check
    _
  $region35: #{clip_forward.1} parent=0 // pred_check_branch
    %34 = sbr.rel (0) target = $region37
  $region36: #{clip_forward.1} parent=0 // pred_region
    _
  $region37: #{clip_forward.1} parent=0 // pred_fallthru
    _
  %s36 = sld [smem:[#allocation2]]
  %v37 = vld [vmem:[%s3] sm:$0xf]
  %v38 = vld [vmem:[%s3 + $0x4] sm:$0xf]
  %v39 = vld [vmem:[%s3 + $0x8] sm:$0xf]
  %v40 = vld [vmem:[%s3 + $0xc] sm:$0xf]
  %v41 = vld [vmem:[%s3 + $0x10] sm:$0xf]
  %v42 = vld [vmem:[%s3 + $0x14] sm:$0xf]
  %v43 = vld [vmem:[%s3 + $0x18] sm:$0xf]
  %v44 = vld [vmem:[%s3 + $0x1c] sm:$0xf]
  %v45 = vld [vmem:[%s3 + $0x20] sm:$0xf]
  %v46 = vld [vmem:[%s3 + $0x24] sm:$0xf]
  %v47 = vld [vmem:[%s3 + $0x28] sm:$0xf]
  %v48 = vld [vmem:[%s3 + $0x2c] sm:$0xf]
  %v49 = vld [vmem:[%s3 + $0x30] sm:$0xf]
  %v50 = vld [vmem:[%s3 + $0x34] sm:$0xf]
  %v51 = vld [vmem:[%s3 + $0x38] sm:$0xf]
  %v52 = vld [vmem:[%s3 + $0x3c] sm:$0xf]
  %v53 = vld [vmem:[%s4] sm:$0xf]
  %v54 = vld [vmem:[%s4 + $0x4] sm:$0xf]
  %v55 = vld [vmem:[%s4 + $0x8] sm:$0xf]
  %v56 = vld [vmem:[%s4 + $0xc] sm:$0xf]
  %v57 = vld [vmem:[%s4 + $0x10] sm:$0xf]
  %v58 = vld [vmem:[%s4 + $0x14] sm:$0xf]
  %v59 = vld [vmem:[%s4 + $0x18] sm:$0xf]
  %v60 = vld [vmem:[%s4 + $0x1c] sm:$0xf]
  %v61 = vld [vmem:[%s4 + $0x20] sm:$0xf]
  %v62 = vld [vmem:[%s4 + $0x24] sm:$0xf]
  %v63 = vld [vmem:[%s4 + $0x28] sm:$0xf]
  %v64 = vld [vmem:[%s4 + $0x2c] sm:$0xf]
  %v65 = vld [vmem:[%s4 + $0x30] sm:$0xf]
  %v66 = vld [vmem:[%s4 + $0x34] sm:$0xf]
  %v67 = vld [vmem:[%s4 + $0x38] sm:$0xf]
  %v68 = vld [vmem:[%s4 + $0x3c] sm:$0xf]
  %v69 = vld [vmem:[%s5] sm:$0x1]
  %v71 = vlaneseq
  %v72 = vshrl.u32 %v71, 7
  %v73 = vsub.s32 0, %v72
  %v74 = vrot.slane %v69, %v73
  %v92 = vunpack.c.l.b16 %v37
  %v93 = vunpack.c.l.b16 %v38
  %v94 = vunpack.c.l.b16 %v39
  %v95 = vunpack.c.l.b16 %v40
  %v96 = vunpack.c.l.b16 %v41
  %v97 = vunpack.c.l.b16 %v42
  %v98 = vunpack.c.l.b16 %v43
  %v99 = vunpack.c.l.b16 %v44
  %v100 = vunpack.c.l.b16 %v45
  %v101 = vunpack.c.l.b16 %v46
  %v102 = vunpack.c.l.b16 %v47
  %v103 = vunpack.c.l.b16 %v48
  %v104 = vunpack.c.l.b16 %v49
  %v105 = vunpack.c.l.b16 %v50
  %v106 = vunpack.c.l.b16 %v51
  %v107 = vunpack.c.l.b16 %v52
  %v108 = vpack.c.b16 %v93, %v92
  %v109 = vpack.c.b16 %v95, %v94
  %v110 = vpack.c.b16 %v97, %v96
  %v111 = vpack.c.b16 %v99, %v98
  %v112 = vpack.c.b16 %v101, %v100
  %v113 = vpack.c.b16 %v103, %v102
  %v114 = vpack.c.b16 %v105, %v104
  %v115 = vpack.c.b16 %v107, %v106
  %v140 = vunpack.c.l.b16 %v53
  %v141 = vunpack.c.l.b16 %v54
  %v142 = vunpack.c.l.b16 %v55
  %v143 = vunpack.c.l.b16 %v56
  %v144 = vunpack.c.l.b16 %v57
  %v145 = vunpack.c.l.b16 %v58
  %v146 = vunpack.c.l.b16 %v59
  %v147 = vunpack.c.l.b16 %v60
  %v148 = vunpack.c.l.b16 %v61
  %v149 = vunpack.c.l.b16 %v62
  %v150 = vunpack.c.l.b16 %v63
  %v151 = vunpack.c.l.b16 %v64
  %v152 = vunpack.c.l.b16 %v65
  %v153 = vunpack.c.l.b16 %v66
  %v154 = vunpack.c.l.b16 %v67
  %v155 = vunpack.c.l.b16 %v68
  %v156 = vpack.c.b16 %v141, %v140
  %v157 = vpack.c.b16 %v143, %v142
  %v158 = vpack.c.b16 %v145, %v144
  %v159 = vpack.c.b16 %v147, %v146
  %v160 = vpack.c.b16 %v149, %v148
  %v161 = vpack.c.b16 %v151, %v150
  %v162 = vpack.c.b16 %v153, %v152
  %v163 = vpack.c.b16 %v155, %v154
  %172 = vmatprep.subr.bf16.mxu0 0
  %173 = vmatpush1.bf16.msra.mxu0 %v156
  %174 = vmatprep.subr.bf16.mxu0 0
  %175 = vmatpush1.bf16.msra.mxu0 %v157
  %176 = vmatprep.subr.bf16.mxu0 0
  %177 = vmatpush1.bf16.msra.mxu0 %v158
  %178 = vmatprep.subr.bf16.mxu0 0
  %179 = vmatpush1.bf16.msra.mxu0 %v159
  %180 = vmatprep.subr.bf16.mxu0 0
  %181 = vmatpush1.bf16.msra.mxu0 %v160
  %182 = vmatprep.subr.bf16.mxu0 0
  %183 = vmatpush1.bf16.msra.mxu0 %v161
  %184 = vmatprep.subr.bf16.mxu0 0
  %185 = vmatpush1.bf16.msra.mxu0 %v162
  %186 = vmatprep.subr.bf16.mxu0 0
  %187 = vmatpush1.bf16.msra.mxu0 %v163
  %188 = vmatprep.subr.bf16.mxu0 0
  %189 = vmatpush1.bf16.msra.mxu0 0
  %190 = vmatprep.subr.bf16.mxu0 0
  %191 = vmatpush1.bf16.msra.mxu0 0
  %192 = vmatprep.subr.bf16.mxu0 0
  %193 = vmatpush1.bf16.msra.mxu0 0
  %194 = vmatprep.subr.bf16.mxu0 0
  %195 = vmatpush1.bf16.msra.mxu0 0
  %196 = vmatprep.subr.bf16.mxu0 0
  %197 = vmatpush1.bf16.msra.mxu0 0
  %198 = vmatprep.subr.bf16.mxu0 0
  %199 = vmatpush1.bf16.msra.mxu0 0
  %200 = vmatprep.subr.bf16.mxu0 0
  %201 = vmatpush1.bf16.msra.mxu0 0
  %202 = vmatprep.subr.bf16.mxu0 0
  %203 = vmatpush1.bf16.msra.mxu0 0
  %204 = vmatprep.mubr.bf16.mxu0 0
  %205 = vmatmul.mubr.bf16.gmra.mrb[0].mxu0 %v108
  %v206 = vpop.f32.mrb[0].mxu0
  %v207 = vadd.f32 %v74, %v206
  %v208 = vpop.f32.mrb[0].mxu0
  %v209 = vpop.f32.mrb[0].mxu0
  %v210 = vadd.f32 %v74, %v209
  %v211 = vpop.f32.mrb[0].mxu0
  %212 = vmatprep.mubr.bf16.mxu0 0
  %213 = vmatmul.mubr.bf16.gmra.mrb[0].mxu0 %v109
  %v214 = vpop.f32.mrb[0].mxu0
  %v215 = vadd.f32 %v74, %v214
  %v216 = vpop.f32.mrb[0].mxu0
  %v217 = vpop.f32.mrb[0].mxu0
  %v218 = vadd.f32 %v74, %v217
  %v219 = vpop.f32.mrb[0].mxu0
  %220 = vmatprep.mubr.bf16.mxu0 0
  %221 = vmatmul.mubr.bf16.gmra.mrb[0].mxu0 %v110
  %v222 = vpop.f32.mrb[0].mxu0
  %v223 = vadd.f32 %v74, %v222
  %v224 = vpop.f32.mrb[0].mxu0
  %v225 = vpop.f32.mrb[0].mxu0
  %v226 = vadd.f32 %v74, %v225
  %v227 = vpop.f32.mrb[0].mxu0
  %228 = vmatprep.mubr.bf16.mxu0 0
  %229 = vmatmul.mubr.bf16.gmra.mrb[0].mxu0 %v111
  %v230 = vpop.f32.mrb[0].mxu0
  %v231 = vadd.f32 %v74, %v230
  %v232 = vpop.f32.mrb[0].mxu0
  %v233 = vpop.f32.mrb[0].mxu0
  %v234 = vadd.f32 %v74, %v233
  %v235 = vpop.f32.mrb[0].mxu0
  %236 = vmatprep.mubr.bf16.mxu0 0
  %237 = vmatmul.mubr.bf16.gmra.mrb[0].mxu0 %v112
  %v238 = vpop.f32.mrb[0].mxu0
  %v239 = vadd.f32 %v74, %v238
  %v240 = vpop.f32.mrb[0].mxu0
  %v241 = vpop.f32.mrb[0].mxu0
  %v242 = vadd.f32 %v74, %v241
  %v243 = vpop.f32.mrb[0].mxu0
  %244 = vmatprep.mubr.bf16.mxu0 0
  %245 = vmatmul.mubr.bf16.gmra.mrb[0].mxu0 %v113
  %v246 = vpop.f32.mrb[0].mxu0
  %v247 = vadd.f32 %v74, %v246
  %v248 = vpop.f32.mrb[0].mxu0
  %v249 = vpop.f32.mrb[0].mxu0
  %v250 = vadd.f32 %v74, %v249
  %v251 = vpop.f32.mrb[0].mxu0
  %252 = vmatprep.mubr.bf16.mxu0 0
  %253 = vmatmul.mubr.bf16.gmra.mrb[0].mxu0 %v114
  %v254 = vpop.f32.mrb[0].mxu0
  %v255 = vadd.f32 %v74, %v254
  %v256 = vpop.f32.mrb[0].mxu0
  %v257 = vpop.f32.mrb[0].mxu0
  %v258 = vadd.f32 %v74, %v257
  %v259 = vpop.f32.mrb[0].mxu0
  %260 = vmatprep.mubr.bf16.mxu0 0
  %261 = vmatmul.mubr.bf16.gmra.mrb[0].mxu0 %v115
  %v262 = vpop.f32.mrb[0].mxu0
  %v263 = vadd.f32 %v74, %v262
  %v264 = vpop.f32.mrb[0].mxu0
  %v265 = vpop.f32.mrb[0].mxu0
  %v266 = vadd.f32 %v74, %v265
  %v267 = vpop.f32.mrb[0].mxu0
  %268 = vdwg.mxu0
  %v269 = vld [vmem:[%s6] sm:$0xf]
  %v270 = vld [vmem:[%s6 + $0x4] sm:$0xf]
  %v271 = vld [vmem:[%s6 + $0x8] sm:$0xf]
  %v272 = vld [vmem:[%s6 + $0xc] sm:$0xf]
  %v273 = vld [vmem:[%s6 + $0x10] sm:$0xf]
  %v274 = vld [vmem:[%s6 + $0x14] sm:$0xf]
  %v275 = vld [vmem:[%s6 + $0x18] sm:$0xf]
  %v276 = vld [vmem:[%s6 + $0x1c] sm:$0xf]
  %v277 = vld [vmem:[%s6 + $0x20] sm:$0xf]
  %v278 = vld [vmem:[%s6 + $0x24] sm:$0xf]
  %v279 = vld [vmem:[%s6 + $0x28] sm:$0xf]
  %v280 = vld [vmem:[%s6 + $0x2c] sm:$0xf]
  %v281 = vld [vmem:[%s6 + $0x30] sm:$0xf]
  %v282 = vld [vmem:[%s6 + $0x34] sm:$0xf]
  %v283 = vld [vmem:[%s6 + $0x38] sm:$0xf]
  %v284 = vld [vmem:[%s6 + $0x3c] sm:$0xf]
  %v285 = vld [vmem:[%s7] sm:$0xf]
  %v286 = vld [vmem:[%s7 + $0x4] sm:$0xf]
  %v287 = vld [vmem:[%s7 + $0x8] sm:$0xf]
  %v288 = vld [vmem:[%s7 + $0xc] sm:$0xf]
  %v289 = vld [vmem:[%s7 + $0x10] sm:$0xf]
  %v290 = vld [vmem:[%s7 + $0x14] sm:$0xf]
  %v291 = vld [vmem:[%s7 + $0x18] sm:$0xf]
  %v292 = vld [vmem:[%s7 + $0x1c] sm:$0xf]
  %v293 = vld [vmem:[%s7 + $0x20] sm:$0xf]
  %v294 = vld [vmem:[%s7 + $0x24] sm:$0xf]
  %v295 = vld [vmem:[%s7 + $0x28] sm:$0xf]
  %v296 = vld [vmem:[%s7 + $0x2c] sm:$0xf]
  %v297 = vld [vmem:[%s7 + $0x30] sm:$0xf]
  %v298 = vld [vmem:[%s7 + $0x34] sm:$0xf]
  %v299 = vld [vmem:[%s7 + $0x38] sm:$0xf]
  %v300 = vld [vmem:[%s7 + $0x3c] sm:$0xf]
  %v301 = vld [vmem:[%s8] sm:$0x1]
  %v303 = vlaneseq
  %v304 = vshrl.u32 %v303, 7
  %v305 = vsub.s32 0, %v304
  %v306 = vrot.slane %v301, %v305
  %v324 = vunpack.c.l.b16 %v269
  %v325 = vunpack.c.l.b16 %v270
  %v326 = vunpack.c.l.b16 %v271
  %v327 = vunpack.c.l.b16 %v272
  %v328 = vunpack.c.l.b16 %v273
  %v329 = vunpack.c.l.b16 %v274
  %v330 = vunpack.c.l.b16 %v275
  %v331 = vunpack.c.l.b16 %v276
  %v332 = vunpack.c.l.b16 %v277
  %v333 = vunpack.c.l.b16 %v278
  %v334 = vunpack.c.l.b16 %v279
  %v335 = vunpack.c.l.b16 %v280
  %v336 = vunpack.c.l.b16 %v281
  %v337 = vunpack.c.l.b16 %v282
  %v338 = vunpack.c.l.b16 %v283
  %v339 = vunpack.c.l.b16 %v284
  %v340 = vpack.c.b16 %v325, %v324
  %v341 = vpack.c.b16 %v327, %v326
  %v342 = vpack.c.b16 %v329, %v328
  %v343 = vpack.c.b16 %v331, %v330
  %v344 = vpack.c.b16 %v333, %v332
  %v345 = vpack.c.b16 %v335, %v334
  %v346 = vpack.c.b16 %v337, %v336
  %v347 = vpack.c.b16 %v339, %v338
  %v372 = vunpack.c.l.b16 %v285
  %v373 = vunpack.c.l.b16 %v286
  %v374 = vunpack.c.l.b16 %v287
  %v375 = vunpack.c.l.b16 %v288
  %v376 = vunpack.c.l.b16 %v289
  %v377 = vunpack.c.l.b16 %v290
  %v378 = vunpack.c.l.b16 %v291
  %v379 = vunpack.c.l.b16 %v292
  %v380 = vunpack.c.l.b16 %v293
  %v381 = vunpack.c.l.b16 %v294
  %v382 = vunpack.c.l.b16 %v295
  %v383 = vunpack.c.l.b16 %v296
  %v384 = vunpack.c.l.b16 %v297
  %v385 = vunpack.c.l.b16 %v298
  %v386 = vunpack.c.l.b16 %v299
  %v387 = vunpack.c.l.b16 %v300
  %v388 = vpack.c.b16 %v373, %v372
  %v389 = vpack.c.b16 %v375, %v374
  %v390 = vpack.c.b16 %v377, %v376
  %v391 = vpack.c.b16 %v379, %v378
  %v392 = vpack.c.b16 %v381, %v380
  %v393 = vpack.c.b16 %v383, %v382
  %v394 = vpack.c.b16 %v385, %v384
  %v395 = vpack.c.b16 %v387, %v386
  %404 = vmatprep.subr.bf16.mxu0 0
  %405 = vmatpush1.bf16.msra.mxu0 %v388
  %406 = vmatprep.subr.bf16.mxu0 0
  %407 = vmatpush1.bf16.msra.mxu0 %v389
  %408 = vmatprep.subr.bf16.mxu0 0
  %409 = vmatpush1.bf16.msra.mxu0 %v390
  %410 = vmatprep.subr.bf16.mxu0 0
  %411 = vmatpush1.bf16.msra.mxu0 %v391
  %412 = vmatprep.subr.bf16.mxu0 0
  %413 = vmatpush1.bf16.msra.mxu0 %v392
  %414 = vmatprep.subr.bf16.mxu0 0
  %415 = vmatpush1.bf16.msra.mxu0 %v393
  %416 = vmatprep.subr.bf16.mxu0 0
  %417 = vmatpush1.bf16.msra.mxu0 %v394
  %418 = vmatprep.subr.bf16.mxu0 0
  %419 = vmatpush1.bf16.msra.mxu0 %v395
  %420 = vmatprep.subr.bf16.mxu0 0
  %421 = vmatpush1.bf16.msra.mxu0 0
  %422 = vmatprep.subr.bf16.mxu0 0
  %423 = vmatpush1.bf16.msra.mxu0 0
  %424 = vmatprep.subr.bf16.mxu0 0
  %425 = vmatpush1.bf16.msra.mxu0 0
  %426 = vmatprep.subr.bf16.mxu0 0
  %427 = vmatpush1.bf16.msra.mxu0 0
  %428 = vmatprep.subr.bf16.mxu0 0
  %429 = vmatpush1.bf16.msra.mxu0 0
  %430 = vmatprep.subr.bf16.mxu0 0
  %431 = vmatpush1.bf16.msra.mxu0 0
  %432 = vmatprep.subr.bf16.mxu0 0
  %433 = vmatpush1.bf16.msra.mxu0 0
  %434 = vmatprep.subr.bf16.mxu0 0
  %435 = vmatpush1.bf16.msra.mxu0 0
  %436 = vmatprep.mubr.bf16.mxu0 0
  %437 = vmatmul.mubr.bf16.gmra.mrb[0].mxu0 %v340
  %v438 = vpop.f32.mrb[0].mxu0
  %v439 = vadd.f32 %v306, %v438
  %v440 = vpop.f32.mrb[0].mxu0
  %v441 = vpop.f32.mrb[0].mxu0
  %v442 = vadd.f32 %v306, %v441
  %v443 = vpop.f32.mrb[0].mxu0
  %444 = vmatprep.mubr.bf16.mxu0 0
  %445 = vmatmul.mubr.bf16.gmra.mrb[0].mxu0 %v341
  %v446 = vpop.f32.mrb[0].mxu0
  %v447 = vadd.f32 %v306, %v446
  %v448 = vpop.f32.mrb[0].mxu0
  %v449 = vpop.f32.mrb[0].mxu0
  %v450 = vadd.f32 %v306, %v449
  %v451 = vpop.f32.mrb[0].mxu0
  %452 = vmatprep.mubr.bf16.mxu0 0
  %453 = vmatmul.mubr.bf16.gmra.mrb[0].mxu0 %v342
  %v454 = vpop.f32.mrb[0].mxu0
  %v455 = vadd.f32 %v306, %v454
  %v456 = vpop.f32.mrb[0].mxu0
  %v457 = vpop.f32.mrb[0].mxu0
  %v458 = vadd.f32 %v306, %v457
  %v459 = vpop.f32.mrb[0].mxu0
  %460 = vmatprep.mubr.bf16.mxu0 0
  %461 = vmatmul.mubr.bf16.gmra.mrb[0].mxu0 %v343
  %v462 = vpop.f32.mrb[0].mxu0
  %v463 = vadd.f32 %v306, %v462
  %v464 = vpop.f32.mrb[0].mxu0
  %v465 = vpop.f32.mrb[0].mxu0
  %v466 = vadd.f32 %v306, %v465
  %v467 = vpop.f32.mrb[0].mxu0
  %468 = vmatprep.mubr.bf16.mxu0 0
  %469 = vmatmul.mubr.bf16.gmra.mrb[0].mxu0 %v344
  %v470 = vpop.f32.mrb[0].mxu0
  %v471 = vadd.f32 %v306, %v470
  %v472 = vpop.f32.mrb[0].mxu0
  %v473 = vpop.f32.mrb[0].mxu0
  %v474 = vadd.f32 %v306, %v473
  %v475 = vpop.f32.mrb[0].mxu0
  %476 = vmatprep.mubr.bf16.mxu0 0
  %477 = vmatmul.mubr.bf16.gmra.mrb[0].mxu0 %v345
  %v478 = vpop.f32.mrb[0].mxu0
  %v479 = vadd.f32 %v306, %v478
  %v480 = vpop.f32.mrb[0].mxu0
  %v481 = vpop.f32.mrb[0].mxu0
  %v482 = vadd.f32 %v306, %v481
  %v483 = vpop.f32.mrb[0].mxu0
  %484 = vmatprep.mubr.bf16.mxu0 0
  %485 = vmatmul.mubr.bf16.gmra.mrb[0].mxu0 %v346
  %v486 = vpop.f32.mrb[0].mxu0
  %v487 = vadd.f32 %v306, %v486
  %v488 = vpop.f32.mrb[0].mxu0
  %v489 = vpop.f32.mrb[0].mxu0
  %v490 = vadd.f32 %v306, %v489
  %v491 = vpop.f32.mrb[0].mxu0
  %492 = vmatprep.mubr.bf16.mxu0 0
  %493 = vmatmul.mubr.bf16.gmra.mrb[0].mxu0 %v347
  %v494 = vpop.f32.mrb[0].mxu0
  %v495 = vadd.f32 %v306, %v494
  %v496 = vpop.f32.mrb[0].mxu0
  %v497 = vpop.f32.mrb[0].mxu0
  %v498 = vadd.f32 %v306, %v497
  %v499 = vpop.f32.mrb[0].mxu0
  %500 = vdwg.mxu0
  %v501 = vld [vmem:[%s2] sm:$0xff]
  %v502 = vld [vmem:[%s2 + $0x8] sm:$0xff]
  %v503 = vld [vmem:[%s1] sm:$0x1]
  %v504 = vlaneseq
  %v505 = vshrl.u32 %v504, 7
  %v506 = vlaneseq
  %v507 = vshrl.u32 %v506, 7
  %v508 = vsub.s32 0, %v507
  %v509 = vrot.slane %v503, %v508
  %vm510 = vcmp.eq.s32.totalorder %v509, %v505
  %v511 = vsel %vm510, 1, 0
  %v512 = vcvt.s32.f32 %v511
  %v513 = vpack.c.bf16 %v512, %v512
  %v514 = vpack.c.bf16 %v502, %v501
  %vm515 = vcmask 130048
  %v517 = vsel %vm515, %v513, 0
  %519 = vmatprep.subr.bf16.mxu0 0
  %520 = vmatpush1.bf16.msra.mxu0 %v514
  %521 = vmatprep.subr.bf16.mxu0 0
  %522 = vmatpush1.bf16.msra.mxu0 0
  %523 = vmatprep.subr.bf16.mxu0 0
  %524 = vmatpush1.bf16.msra.mxu0 0
  %525 = vmatprep.subr.bf16.mxu0 0
  %526 = vmatpush1.bf16.msra.mxu0 0
  %527 = vmatprep.subr.bf16.mxu0 0
  %528 = vmatpush1.bf16.msra.mxu0 0
  %529 = vmatprep.subr.bf16.mxu0 0
  %530 = vmatpush1.bf16.msra.mxu0 0
  %531 = vmatprep.subr.bf16.mxu0 0
  %532 = vmatpush1.bf16.msra.mxu0 0
  %533 = vmatprep.subr.bf16.mxu0 0
  %534 = vmatpush1.bf16.msra.mxu0 0
  %535 = vmatprep.subr.bf16.mxu0 0
  %536 = vmatpush1.bf16.msra.mxu0 0
  %537 = vmatprep.subr.bf16.mxu0 0
  %538 = vmatpush1.bf16.msra.mxu0 0
  %539 = vmatprep.subr.bf16.mxu0 0
  %540 = vmatpush1.bf16.msra.mxu0 0
  %541 = vmatprep.subr.bf16.mxu0 0
  %542 = vmatpush1.bf16.msra.mxu0 0
  %543 = vmatprep.subr.bf16.mxu0 0
  %544 = vmatpush1.bf16.msra.mxu0 0
  %545 = vmatprep.subr.bf16.mxu0 0
  %546 = vmatpush1.bf16.msra.mxu0 0
  %547 = vmatprep.subr.bf16.mxu0 0
  %548 = vmatpush1.bf16.msra.mxu0 0
  %549 = vmatprep.subr.bf16.mxu0 0
  %550 = vmatpush1.bf16.msra.mxu0 0
  %551 = vmatprep.mubr.bf16.mxu0 0
  %552 = vmatmul.mubr.bf16.gmra.mrb[0].mxu0 %v517
  %v553 = vpop.f32.mrb[0].mxu0
  %v554 = vadd.f32 0.0, %v553
  %v555 = vpop.f32.mrb[0].mxu0
  %v556 = vpop.f32.mrb[0].mxu0
  %v557 = vpop.f32.mrb[0].mxu0
  %558 = vdwg.mxu0
  %v559 = vmul.f32 %v501, %v501
  %v560 = vmul.f32 %v502, %v502
  %561 = vadd.xlane.f32.xlu0 %v559
  %v562 = vpop.xlane.xlu0 %561
  %563 = vadd.xlane.f32.xlu0 %v560
  %v564 = vpop.xlane.xlu0 %563
  %v565 = vadd.f32 %v562, 1e-12
  %v566 = vadd.f32 %v564, 1e-12
  %v567 = vrsqrt.pop %v565
  %v568 = vrsqrt.pop %v566
  %v569 = vmul.f32 %v501, %v567
  %v570 = vmul.f32 %v502, %v568
  %v571 = vstv %s36
  %v572 = vmul.f32 %v569, %v571
  %v573 = vmul.f32 %v570, %v571
  %v574 = vpack.c.bf16 %v573, %v572
  %v575 = vmul.f32 %v554, %v554
  %576 = vadd.xlane.f32.xlu0 %v575
  %v577 = vpop.xlane.xlu0 %576
  %v578 = vadd.f32 %v577, 1e-12
  %v579 = vrsqrt.pop %v578
  %v580 = vmul.f32 %v554, %v579
  %v581 = vmul.f32 %v580, %v571
  %v582 = vpack.c.bf16 %v581, %v581
  %v583 = vmul.f32 %v207, %v207
  %v584 = vmul.f32 %v210, %v210
  %v585 = vmul.f32 %v215, %v215
  %v586 = vmul.f32 %v218, %v218
  %v587 = vmul.f32 %v223, %v223
  %v588 = vmul.f32 %v226, %v226
  %v589 = vmul.f32 %v231, %v231
  %v590 = vmul.f32 %v234, %v234
  %v591 = vmul.f32 %v239, %v239
  %v592 = vmul.f32 %v242, %v242
  %v593 = vmul.f32 %v247, %v247
  %v594 = vmul.f32 %v250, %v250
  %v595 = vmul.f32 %v255, %v255
  %v596 = vmul.f32 %v258, %v258
  %v597 = vmul.f32 %v263, %v263
  %v598 = vmul.f32 %v266, %v266
  %599 = vadd.xlane.f32.xlu0 %v583
  %v600 = vpop.xlane.xlu0 %599
  %601 = vadd.xlane.f32.xlu0 %v584
  %v602 = vpop.xlane.xlu0 %601
  %603 = vadd.xlane.f32.xlu0 %v585
  %v604 = vpop.xlane.xlu0 %603
  %605 = vadd.xlane.f32.xlu0 %v586
  %v606 = vpop.xlane.xlu0 %605
  %607 = vadd.xlane.f32.xlu0 %v587
  %v608 = vpop.xlane.xlu0 %607
  %609 = vadd.xlane.f32.xlu0 %v588
  %v610 = vpop.xlane.xlu0 %609
  %611 = vadd.xlane.f32.xlu0 %v589
  %v612 = vpop.xlane.xlu0 %611
  %613 = vadd.xlane.f32.xlu0 %v590
  %v614 = vpop.xlane.xlu0 %613
  %615 = vadd.xlane.f32.xlu0 %v591
  %v616 = vpop.xlane.xlu0 %615
  %617 = vadd.xlane.f32.xlu0 %v592
  %v618 = vpop.xlane.xlu0 %617
  %619 = vadd.xlane.f32.xlu0 %v593
  %v620 = vpop.xlane.xlu0 %619
  %621 = vadd.xlane.f32.xlu0 %v594
  %v622 = vpop.xlane.xlu0 %621
  %623 = vadd.xlane.f32.xlu0 %v595
  %v624 = vpop.xlane.xlu0 %623
  %625 = vadd.xlane.f32.xlu0 %v596
  %v626 = vpop.xlane.xlu0 %625
  %627 = vadd.xlane.f32.xlu0 %v597
  %v628 = vpop.xlane.xlu0 %627
  %629 = vadd.xlane.f32.xlu0 %v598
  %v630 = vpop.xlane.xlu0 %629
  %v631 = vadd.f32 %v600, 1e-12
  %v632 = vadd.f32 %v602, 1e-12
  %v633 = vadd.f32 %v604, 1e-12
  %v634 = vadd.f32 %v606, 1e-12
  %v635 = vadd.f32 %v608, 1e-12
  %v636 = vadd.f32 %v610, 1e-12
  %v637 = vadd.f32 %v612, 1e-12
  %v638 = vadd.f32 %v614, 1e-12
  %v639 = vadd.f32 %v616, 1e-12
  %v640 = vadd.f32 %v618, 1e-12
  %v641 = vadd.f32 %v620, 1e-12
  %v642 = vadd.f32 %v622, 1e-12
  %v643 = vadd.f32 %v624, 1e-12
  %v644 = vadd.f32 %v626, 1e-12
  %v645 = vadd.f32 %v628, 1e-12
  %v646 = vadd.f32 %v630, 1e-12
  %v647 = vrsqrt.pop %v631
  %v648 = vrsqrt.pop %v632
  %v649 = vrsqrt.pop %v633
  %v650 = vrsqrt.pop %v634
  %v651 = vrsqrt.pop %v635
  %v652 = vrsqrt.pop %v636
  %v653 = vrsqrt.pop %v637
  %v654 = vrsqrt.pop %v638
  %v655 = vrsqrt.pop %v639
  %v656 = vrsqrt.pop %v640
  %v657 = vrsqrt.pop %v641
  %v658 = vrsqrt.pop %v642
  %v659 = vrsqrt.pop %v643
  %v660 = vrsqrt.pop %v644
  %v661 = vrsqrt.pop %v645
  %v662 = vrsqrt.pop %v646
  %v663 = vmul.f32 %v207, %v647
  %v664 = vmul.f32 %v210, %v648
  %v665 = vmul.f32 %v215, %v649
  %v666 = vmul.f32 %v218, %v650
  %v667 = vmul.f32 %v223, %v651
  %v668 = vmul.f32 %v226, %v652
  %v669 = vmul.f32 %v231, %v653
  %v670 = vmul.f32 %v234, %v654
  %v671 = vmul.f32 %v239, %v655
  %v672 = vmul.f32 %v242, %v656
  %v673 = vmul.f32 %v247, %v657
  %v674 = vmul.f32 %v250, %v658
  %v675 = vmul.f32 %v255, %v659
  %v676 = vmul.f32 %v258, %v660
  %v677 = vmul.f32 %v263, %v661
  %v678 = vmul.f32 %v266, %v662
  %v679 = vpack.c.bf16 %v664, %v663
  %v680 = vpack.c.bf16 %v666, %v665
  %v681 = vpack.c.bf16 %v668, %v667
  %v682 = vpack.c.bf16 %v670, %v669
  %v683 = vpack.c.bf16 %v672, %v671
  %v684 = vpack.c.bf16 %v674, %v673
  %v685 = vpack.c.bf16 %v676, %v675
  %v686 = vpack.c.bf16 %v678, %v677
  %v687 = vmul.f32 %v439, %v439
  %v688 = vmul.f32 %v442, %v442
  %v689 = vmul.f32 %v447, %v447
  %v690 = vmul.f32 %v450, %v450
  %v691 = vmul.f32 %v455, %v455
  %v692 = vmul.f32 %v458, %v458
  %v693 = vmul.f32 %v463, %v463
  %v694 = vmul.f32 %v466, %v466
  %v695 = vmul.f32 %v471, %v471
  %v696 = vmul.f32 %v474, %v474
  %v697 = vmul.f32 %v479, %v479
  %v698 = vmul.f32 %v482, %v482
  %v699 = vmul.f32 %v487, %v487
  %v700 = vmul.f32 %v490, %v490
  %v701 = vmul.f32 %v495, %v495
  %v702 = vmul.f32 %v498, %v498
  %703 = vadd.xlane.f32.xlu0 %v687
  %v704 = vpop.xlane.xlu0 %703
  %705 = vadd.xlane.f32.xlu0 %v688
  %v706 = vpop.xlane.xlu0 %705
  %707 = vadd.xlane.f32.xlu0 %v689
  %v708 = vpop.xlane.xlu0 %707
  %709 = vadd.xlane.f32.xlu0 %v690
  %v710 = vpop.xlane.xlu0 %709
  %711 = vadd.xlane.f32.xlu0 %v691
  %v712 = vpop.xlane.xlu0 %711
  %713 = vadd.xlane.f32.xlu0 %v692
  %v714 = vpop.xlane.xlu0 %713
  %715 = vadd.xlane.f32.xlu0 %v693
  %v716 = vpop.xlane.xlu0 %715
  %717 = vadd.xlane.f32.xlu0 %v694
  %v718 = vpop.xlane.xlu0 %717
  %719 = vadd.xlane.f32.xlu0 %v695
  %v720 = vpop.xlane.xlu0 %719
  %721 = vadd.xlane.f32.xlu0 %v696
  %v722 = vpop.xlane.xlu0 %721
  %723 = vadd.xlane.f32.xlu0 %v697
  %v724 = vpop.xlane.xlu0 %723
  %725 = vadd.xlane.f32.xlu0 %v698
  %v726 = vpop.xlane.xlu0 %725
  %727 = vadd.xlane.f32.xlu0 %v699
  %v728 = vpop.xlane.xlu0 %727
  %729 = vadd.xlane.f32.xlu0 %v700
  %v730 = vpop.xlane.xlu0 %729
  %731 = vadd.xlane.f32.xlu0 %v701
  %v732 = vpop.xlane.xlu0 %731
  %733 = vadd.xlane.f32.xlu0 %v702
  %v734 = vpop.xlane.xlu0 %733
  %v735 = vadd.f32 %v704, 1e-12
  %v736 = vadd.f32 %v706, 1e-12
  %v737 = vadd.f32 %v708, 1e-12
  %v738 = vadd.f32 %v710, 1e-12
  %v739 = vadd.f32 %v712, 1e-12
  %v740 = vadd.f32 %v714, 1e-12
  %v741 = vadd.f32 %v716, 1e-12
  %v742 = vadd.f32 %v718, 1e-12
  %v743 = vadd.f32 %v720, 1e-12
  %v744 = vadd.f32 %v722, 1e-12
  %v745 = vadd.f32 %v724, 1e-12
  %v746 = vadd.f32 %v726, 1e-12
  %v747 = vadd.f32 %v728, 1e-12
  %v748 = vadd.f32 %v730, 1e-12
  %v749 = vadd.f32 %v732, 1e-12
  %v750 = vadd.f32 %v734, 1e-12
  %v751 = vrsqrt.pop %v735
  %v752 = vrsqrt.pop %v736
  %v753 = vrsqrt.pop %v737
  %v754 = vrsqrt.pop %v738
  %v755 = vrsqrt.pop %v739
  %v756 = vrsqrt.pop %v740
  %v757 = vrsqrt.pop %v741
  %v758 = vrsqrt.pop %v742
  %v759 = vrsqrt.pop %v743
  %v760 = vrsqrt.pop %v744
  %v761 = vrsqrt.pop %v745
  %v762 = vrsqrt.pop %v746
  %v763 = vrsqrt.pop %v747
  %v764 = vrsqrt.pop %v748
  %v765 = vrsqrt.pop %v749
  %v766 = vrsqrt.pop %v750
  %v767 = vmul.f32 %v439, %v751
  %v768 = vmul.f32 %v442, %v752
  %v769 = vmul.f32 %v447, %v753
  %v770 = vmul.f32 %v450, %v754
  %v771 = vmul.f32 %v455, %v755
  %v772 = vmul.f32 %v458, %v756
  %v773 = vmul.f32 %v463, %v757
  %v774 = vmul.f32 %v466, %v758
  %v775 = vmul.f32 %v471, %v759
  %v776 = vmul.f32 %v474, %v760
  %v777 = vmul.f32 %v479, %v761
  %v778 = vmul.f32 %v482, %v762
  %v779 = vmul.f32 %v487, %v763
  %v780 = vmul.f32 %v490, %v764
  %v781 = vmul.f32 %v495, %v765
  %v782 = vmul.f32 %v498, %v766
  %v783 = vpack.c.bf16 %v768, %v767
  %v784 = vpack.c.bf16 %v770, %v769
  %v785 = vpack.c.bf16 %v772, %v771
  %v786 = vpack.c.bf16 %v774, %v773
  %v787 = vpack.c.bf16 %v776, %v775
  %v788 = vpack.c.bf16 %v778, %v777
  %v789 = vpack.c.bf16 %v780, %v779
  %v790 = vpack.c.bf16 %v782, %v781
  %791 = vmatprep.subr.bf16.mxu0 0
  %792 = vmatpush1.bf16.xpose.msra.mxu0 %v679
  %793 = vmatprep.subr.bf16.mxu0 0
  %794 = vmatpush1.bf16.xpose.msra.mxu0 %v680
  %795 = vmatprep.subr.bf16.mxu0 0
  %796 = vmatpush1.bf16.xpose.msra.mxu0 %v681
  %797 = vmatprep.subr.bf16.mxu0 0
  %798 = vmatpush1.bf16.xpose.msra.mxu0 %v682
  %799 = vmatprep.subr.bf16.mxu0 0
  %800 = vmatpush1.bf16.xpose.msra.mxu0 %v683
  %801 = vmatprep.subr.bf16.mxu0 0
  %802 = vmatpush1.bf16.xpose.msra.mxu0 %v684
  %803 = vmatprep.subr.bf16.mxu0 0
  %804 = vmatpush1.bf16.xpose.msra.mxu0 %v685
  %805 = vmatprep.subr.bf16.mxu0 0
  %806 = vmatpush1.bf16.xpose.msra.mxu0 %v686
  %807 = vmatprep.subr.bf16.mxu0 0
  %808 = vmatpush1.bf16.xpose.msra.mxu0 0
  %809 = vmatprep.subr.bf16.mxu0 0
  %810 = vmatpush1.bf16.xpose.msra.mxu0 0
  %811 = vmatprep.subr.bf16.mxu0 0
  %812 = vmatpush1.bf16.xpose.msra.mxu0 0
  %813 = vmatprep.subr.bf16.mxu0 0
  %814 = vmatpush1.bf16.xpose.msra.mxu0 0
  %815 = vmatprep.subr.bf16.mxu0 0
  %816 = vmatpush1.bf16.xpose.msra.mxu0 0
  %817 = vmatprep.subr.bf16.mxu0 0
  %818 = vmatpush1.bf16.xpose.msra.mxu0 0
  %819 = vmatprep.subr.bf16.mxu0 0
  %820 = vmatpush1.bf16.xpose.msra.mxu0 0
  %821 = vmatprep.subr.bf16.mxu0 0
  %822 = vmatpush1.bf16.xpose.msra.mxu0 0
  %823 = vmatprep.mubr.bf16.mxu0 0
  %824 = vmatmul.mubr.bf16.gmra.mrb[0].mxu0 %v574
  %v825 = vpop.f32.mrb[0].mxu0
  %v826 = vadd.f32 0.0, %v825
  %v827 = vpop.f32.mrb[0].mxu0
  %v828 = vpop.f32.mrb[0].mxu0
  %v829 = vadd.f32 0.0, %v828
  %v830 = vpop.f32.mrb[0].mxu0
  %831 = vdwg.mxu0
  %832 = vst [vmem:[%s9] sm:$0xff] %v826
  %833 = vst [vmem:[%s9 + $0x8] sm:$0xff] %v829
  %834 = vmatprep.subr.bf16.mxu0 0
  %835 = vmatpush1.bf16.xpose.msra.mxu0 %v783
  %836 = vmatprep.subr.bf16.mxu0 0
  %837 = vmatpush1.bf16.xpose.msra.mxu0 %v784
  %838 = vmatprep.subr.bf16.mxu0 0
  %839 = vmatpush1.bf16.xpose.msra.mxu0 %v785
  %840 = vmatprep.subr.bf16.mxu0 0
  %841 = vmatpush1.bf16.xpose.msra.mxu0 %v786
  %842 = vmatprep.subr.bf16.mxu0 0
  %843 = vmatpush1.bf16.xpose.msra.mxu0 %v787
  %844 = vmatprep.subr.bf16.mxu0 0
  %845 = vmatpush1.bf16.xpose.msra.mxu0 %v788
  %846 = vmatprep.subr.bf16.mxu0 0
  %847 = vmatpush1.bf16.xpose.msra.mxu0 %v789
  %848 = vmatprep.subr.bf16.mxu0 0
  %849 = vmatpush1.bf16.xpose.msra.mxu0 %v790
  %850 = vmatprep.subr.bf16.mxu0 0
  %851 = vmatpush1.bf16.xpose.msra.mxu0 0
  %852 = vmatprep.subr.bf16.mxu0 0
  %853 = vmatpush1.bf16.xpose.msra.mxu0 0
  %854 = vmatprep.subr.bf16.mxu0 0
  %855 = vmatpush1.bf16.xpose.msra.mxu0 0
  %856 = vmatprep.subr.bf16.mxu0 0
  %857 = vmatpush1.bf16.xpose.msra.mxu0 0
  %858 = vmatprep.subr.bf16.mxu0 0
  %859 = vmatpush1.bf16.xpose.msra.mxu0 0
  %860 = vmatprep.subr.bf16.mxu0 0
  %861 = vmatpush1.bf16.xpose.msra.mxu0 0
  %862 = vmatprep.subr.bf16.mxu0 0
  %863 = vmatpush1.bf16.xpose.msra.mxu0 0
  %864 = vmatprep.subr.bf16.mxu0 0
  %865 = vmatpush1.bf16.xpose.msra.mxu0 0
  %866 = vmatprep.mubr.bf16.mxu0 0
  %867 = vmatmul.mubr.bf16.gmra.mrb[0].mxu0 %v582
  %v868 = vpop.f32.mrb[0].mxu0
  %v869 = vadd.f32 0.0, %v868
  %v870 = vpop.f32.mrb[0].mxu0
  %v871 = vpop.f32.mrb[0].mxu0
  %v872 = vpop.f32.mrb[0].mxu0
  %873 = vdwg.mxu0
  %874 = vst [vmem:[%s10] sm:$0xff] %v869
  // Predicated region
  $region38: #{clip_forward.1} parent=0 // pred_check
    _
  $region39: #{clip_forward.1} parent=0 // pred_check_branch
    %876 = sbr.rel (0) target = $region41
  $region40: #{clip_forward.1} parent=0 // pred_region
    _
  $region41: #{clip_forward.1} parent=0 // pred_fallthru
    _
  // Predicated region
  $region42: #{clip_forward.1} parent=0 // pred_check
    _
  $region43: #{clip_forward.1} parent=0 // pred_check_branch
    %878 = sbr.rel (0) target = $region45
  $region44: #{clip_forward.1} parent=0 // pred_region
    _
  $region45: #{clip_forward.1} parent=0 // pred_fallthru
    _
  // Predicated region
  $region46: #{clip_forward.1} parent=0 // pred_check
    _
  $region47: #{clip_forward.1} parent=0 // pred_check_branch
    %880 = sbr.rel (0) target = $region49
  $region48: #{clip_forward.1} parent=0 // pred_region
    _
  $region49: #{clip_forward.1} parent=0 // pred_fallthru
    _
  // Predicated region
  $region50: #{clip_forward.1} parent=0 // pred_check
    _
  $region51: #{clip_forward.1} parent=0 // pred_check_branch
    %882 = sbr.rel (0) target = $region53
  $region52: #{clip_forward.1} parent=0 // pred_region
    _
  $region53: #{clip_forward.1} parent=0 // pred_fallthru
    _

</llo_original>
